<compile_context>
chip_gen: v5e
topology: v5e:2x2
jax: 0.10.0
libtpu: 0.0.40
codegen_flags: <defaults>
</compile_context>

<pallas_src>
import jax
import jax.numpy as jnp
from jax.experimental import pallas as pl
from jax.experimental.pallas import tpu as pltpu


def _value_kernel(x_ref, w1_ref, b1_ref, w2_ref, b2_ref, wv_ref, bv_ref, o_ref):
    # fc1 + relu   (bf16 MXU inputs, f32 accumulation, f32 epilogue)
    h1 = jnp.dot(x_ref[...], w1_ref[...], preferred_element_type=jnp.float32)
    h1 = jnp.maximum(h1 + b1_ref[...], 0.0)
    # fc2 + relu
    h2 = jnp.dot(h1.astype(jnp.bfloat16), w2_ref[...],
                 preferred_element_type=jnp.float32)
    h2 = jnp.maximum(h2 + b2_ref[...], 0.0)
    # value head: 1-wide output -> VPU multiply + XLU lane-reduce in f32
    # (no 128-lane padded MXU pass, no padded writeback).
    o_ref[...] = jnp.sum(h2 * wv_ref[...], axis=-1, keepdims=True) + bv_ref[...]


def _round_up(x, m):
    return ((x + m - 1) // m) * m


_TB_CAP = 2048  # VMEM cap per tile: bf16 x tile + f32 h1/h2 temporaries stay a few MiB.


def _choose_tiling(B):
    """Return (TB, n_tiles, B_pad) — few, large, 256-aligned batch tiles."""
    B8 = _round_up(B, 8)
    if B8 <= 256:
        # Single tile: per-grid-step overhead dwarfs the MXU work at these sizes.
        return B8, 1, B8
    # At least 2 'parallel' tiles so both TensorCores of a v7x chip get work;
    # 256-aligned tiles match the 256x256 MXU on v6e/v7x (also fine on v5e).
    n_tiles = max(2, -(-B8 // _TB_CAP))
    TB = min(_TB_CAP, _round_up(-(-B8 // n_tiles), 256))
    n_tiles = -(-B8 // TB)
    return TB, n_tiles, n_tiles * TB


def value_network_forward(state, kparams):
    """state: (B, D) float; kparams from prepare_kernel_params. Returns (B, 1) f32."""
    w1, b1 = kparams["w1"], kparams["b1"]
    w2, b2 = kparams["w2"], kparams["b2"]
    wv, bv = kparams["wv"], kparams["bv"]

    B, D = state.shape
    fc1 = w1.shape[1]
    fc2 = w2.shape[1]

    TB, n_tiles, B_pad = _choose_tiling(B)

    # bf16 state halves the dominant per-row HBM read for the kernel.
    x = state.astype(jnp.bfloat16)
    if B_pad != B:
        x = jnp.pad(x, ((0, B_pad - B), (0, 0)))

    # Advisory cost estimate (static shapes -> plain Python ints).
    flops = 2 * B_pad * (D * fc1 + fc1 * fc2 + fc2)
    bytes_accessed = (
        B_pad * D * 2                      # bf16 state in
        + (D * fc1 + fc1 * fc2) * 2        # bf16 weights
        + (fc1 + fc2 + fc2 + 1) * 4        # f32 biases + f32 value head row
        + B_pad * 4                        # (B_pad, 1) f32 output
    )

    const = lambda shape: pl.BlockSpec(shape, lambda i: (0, 0))  # VMEM-resident

    out = pl.pallas_call(
        _value_kernel,
        out_shape=jax.ShapeDtypeStruct((B_pad, 1), jnp.float32),
        grid_spec=pltpu.PrefetchScalarGridSpec(
            num_scalar_prefetch=0,
            grid=(n_tiles,),
            in_specs=[
                pl.BlockSpec((TB, D), lambda i: (i, 0)),   # state tile moves with grid
                const((D, fc1)),
                const((1, fc1)),
                const((fc1, fc2)),
                const((1, fc2)),
                const((1, fc2)),                            # value-head row (f32)
                const((1, 1)),
            ],
            out_specs=pl.BlockSpec((TB, 1), lambda i: (i, 0)),
        ),
        compiler_params=pltpu.CompilerParams(
            dimension_semantics=("parallel",)),
        cost_estimate=pl.CostEstimate(
            flops=flops, transcendentals=0, bytes_accessed=bytes_accessed),
    )(x, w1, b1, w2, b2, wv, bv)

    return out if B_pad == B else out[:B]


def init_params(key, input_dim, fc1_dims=256, fc2_dims=256):
    """Deterministic init mimicking nn.Linear default (uniform(-1/sqrt(fan_in), +)).

    Weights are stored transposed vs. PyTorch, i.e. (in_features, out_features),
    so every layer is a plain `x @ W + b`.
    """
    ks = jax.random.split(key, 6)

    def lin(kw, kb, fan_in, fan_out):
        bound = 1.0 / jnp.sqrt(fan_in)
        w = jax.random.uniform(kw, (fan_in, fan_out), jnp.float32, -bound, bound)
        b = jax.random.uniform(kb, (fan_out,), jnp.float32, -bound, bound)
        return w, b

    w1, b1 = lin(ks[0], ks[1], input_dim, fc1_dims)
    w2, b2 = lin(ks[2], ks[3], fc1_dims, fc2_dims)
    wv, bv = lin(ks[4], ks[5], fc2_dims, 1)
    return {"w1": w1, "b1": b1, "w2": w2, "b2": b2, "wv": wv, "bv": bv}


def prepare_kernel_params(params):
    """One-time conversion to the kernel layout: bf16 matmul weights, 2-D f32
    biases, and the 1-wide value head kept in f32 as a (1, fc2) row (VPU head,
    no lane padding).  Done outside the per-step path."""
    return {
        "w1": params["w1"].astype(jnp.bfloat16),
        "b1": params["b1"].reshape(1, -1).astype(jnp.float32),
        "w2": params["w2"].astype(jnp.bfloat16),
        "b2": params["b2"].reshape(1, -1).astype(jnp.float32),
        "wv": params["wv"].reshape(1, -1).astype(jnp.float32),
        "bv": params["bv"].reshape(1, 1).astype(jnp.float32),
    }


def reference_forward(state, params):
    h1 = jnp.maximum(state @ params["w1"] + params["b1"], 0.0)
    h2 = jnp.maximum(h1 @ params["w2"] + params["b2"], 0.0)
    return h2 @ params["wv"] + params["bv"]


if __name__ == "__main__":
    key = jax.random.PRNGKey(0)
    k_param, k_state = jax.random.split(key)

    D, FC1, FC2 = 32, 256, 256        # input_dims=(32,), module defaults for fc1/fc2
    params = init_params(k_param, D, FC1, FC2)
    kparams = prepare_kernel_params(params)   # once, outside the step loop

    fwd = jax.jit(value_network_forward)

    # B=256 -> single exact tile (no padding, no row slice);
    # B=384 -> two 256-row 'parallel' tiles with 128 zero-padded rows.
    for B in (256, 384):
        state = jax.random.normal(jax.random.fold_in(k_state, B), (B, D), jnp.float32)
        v = fwd(state, kparams)
        jax.block_until_ready(v)

        v_ref = reference_forward(state, params)
        assert v.shape == (B, 1), v.shape
        # bf16 MXU inputs with f32 accumulation vs. a pure-f32 reference: allow
        # bf16 rounding through two 256-wide layers.
        max_err = jnp.max(jnp.abs(v - v_ref))
        assert jnp.allclose(v, v_ref, atol=3e-2, rtol=3e-2), (
            f"mismatch vs reference at B={B}: max abs err {max_err}")

    print("KERNEL_OK")
</pallas_src>

<mosaic_0001>
module attributes {stable_mosaic.version = 11 : i64} {
  func.func @_value_kernel(%arg0: i32, %arg1: memref<256x32xbf16, #tpu.memory_space<vmem>>, %arg2: memref<32x256xbf16, #tpu.memory_space<vmem>>, %arg3: memref<1x256xf32, #tpu.memory_space<vmem>>, %arg4: memref<256x256xbf16, #tpu.memory_space<vmem>>, %arg5: memref<1x256xf32, #tpu.memory_space<vmem>>, %arg6: memref<1x256xf32, #tpu.memory_space<vmem>>, %arg7: memref<1x1xf32, #tpu.memory_space<vmem>>, %arg8: memref<256x1xf32, #tpu.memory_space<vmem>>) attributes {dimension_semantics = [#tpu.dimension_semantics<parallel>], iteration_bounds = array<i64: 1>, scalar_prefetch = 0 : i64, scratch_operands = 0 : i64, tpu.core_type = #tpu.core_type<tc>, window_params = [{transform_indices = @transform_0, window_bounds = array<i64: 256, 32>}, {pipeline_mode = #tpu.pipeline_mode<synchronous>, transform_indices = @transform_1, window_bounds = array<i64: 32, 256>}, {pipeline_mode = #tpu.pipeline_mode<synchronous>, transform_indices = @transform_2, window_bounds = array<i64: 1, 256>}, {pipeline_mode = #tpu.pipeline_mode<synchronous>, transform_indices = @transform_3, window_bounds = array<i64: 256, 256>}, {pipeline_mode = #tpu.pipeline_mode<synchronous>, transform_indices = @transform_4, window_bounds = array<i64: 1, 256>}, {pipeline_mode = #tpu.pipeline_mode<synchronous>, transform_indices = @transform_5, window_bounds = array<i64: 1, 256>}, {pipeline_mode = #tpu.pipeline_mode<synchronous>, transform_indices = @transform_6, window_bounds = array<i64: 1, 1>}, {transform_indices = @transform_7, window_bounds = array<i64: 256, 1>}]} {
    %c0 = arith.constant 0 : index
    %c0_0 = arith.constant 0 : index
    %0 = vector.load %arg1[%c0, %c0_0] : memref<256x32xbf16, #tpu.memory_space<vmem>>, vector<256x32xbf16>
    %c0_1 = arith.constant 0 : index
    %c0_2 = arith.constant 0 : index
    %1 = vector.load %arg2[%c0_1, %c0_2] : memref<32x256xbf16, #tpu.memory_space<vmem>>, vector<32x256xbf16>
    %cst = arith.constant dense<0.000000e+00> : vector<256x256xf32>
    %2 = tpu.matmul %0, %1, %cst {dimension_numbers = #tpu.dot_dimension_numbers<[1], [0], [0], [1], [0, 0, 1, 1], [], []>} : vector<256x32xbf16>, vector<32x256xbf16>, vector<256x256xf32> -> vector<256x256xf32>
    %c0_3 = arith.constant 0 : index
    %c0_4 = arith.constant 0 : index
    %3 = vector.load %arg3[%c0_3, %c0_4] : memref<1x256xf32, #tpu.memory_space<vmem>>, vector<1x256xf32>
    %4 = vector.broadcast %3 : vector<1x256xf32> to vector<256x256xf32>
    %5 = arith.addf %2, %4 : vector<256x256xf32>
    %cst_5 = arith.constant 0.000000e+00 : f32
    %6 = vector.broadcast %cst_5 : f32 to vector<256x256xf32>
    %7 = arith.maximumf %5, %6 : vector<256x256xf32>
    %8 = arith.truncf %7 : vector<256x256xf32> to vector<256x256xbf16>
    %c0_6 = arith.constant 0 : index
    %c0_7 = arith.constant 0 : index
    %9 = vector.load %arg4[%c0_6, %c0_7] : memref<256x256xbf16, #tpu.memory_space<vmem>>, vector<256x256xbf16>
    %cst_8 = arith.constant dense<0.000000e+00> : vector<256x256xf32>
    %10 = tpu.matmul %8, %9, %cst_8 {dimension_numbers = #tpu.dot_dimension_numbers<[1], [0], [0], [1], [0, 0, 1, 1], [], []>} : vector<256x256xbf16>, vector<256x256xbf16>, vector<256x256xf32> -> vector<256x256xf32>
    %c0_9 = arith.constant 0 : index
    %c0_10 = arith.constant 0 : index
    %11 = vector.load %arg5[%c0_9, %c0_10] : memref<1x256xf32, #tpu.memory_space<vmem>>, vector<1x256xf32>
    %12 = vector.broadcast %11 : vector<1x256xf32> to vector<256x256xf32>
    %13 = arith.addf %10, %12 : vector<256x256xf32>
    %cst_11 = arith.constant 0.000000e+00 : f32
    %14 = vector.broadcast %cst_11 : f32 to vector<256x256xf32>
    %15 = arith.maximumf %13, %14 : vector<256x256xf32>
    %c0_12 = arith.constant 0 : index
    %c0_13 = arith.constant 0 : index
    %16 = vector.load %arg6[%c0_12, %c0_13] : memref<1x256xf32, #tpu.memory_space<vmem>>, vector<1x256xf32>
    %17 = vector.broadcast %16 : vector<1x256xf32> to vector<256x256xf32>
    %18 = arith.mulf %15, %17 : vector<256x256xf32>
    %cst_14 = arith.constant dense<0.000000e+00> : vector<256xf32>
    %19 = vector.multi_reduction <add>, %18, %cst_14 [1] : vector<256x256xf32> to vector<256xf32>
    %20 = vector.shape_cast %19 : vector<256xf32> to vector<256x1xf32>
    %c0_15 = arith.constant 0 : index
    %c0_16 = arith.constant 0 : index
    %21 = vector.load %arg7[%c0_15, %c0_16] : memref<1x1xf32, #tpu.memory_space<vmem>>, vector<1x1xf32>
    %22 = vector.broadcast %21 : vector<1x1xf32> to vector<256x1xf32>
    %23 = arith.addf %20, %22 : vector<256x1xf32>
    %c0_17 = arith.constant 0 : index
    %c0_18 = arith.constant 0 : index
    %24 = vector.load %arg8[%c0_17, %c0_18] : memref<256x1xf32, #tpu.memory_space<vmem>>, vector<256x1xf32>
    tpu.vector_store %arg8[%c0_17, %c0_18], %23 {strides = array<i32>} : memref<256x1xf32, #tpu.memory_space<vmem>>, vector<256x1xf32>,
    return
  }
  func.func @transform_0(%arg0: i32) -> (i32, i32) {
    %c0_i32 = arith.constant 0 : i32
    %c0_i32_0 = arith.constant 0 : i32
    return %arg0, %c0_i32 : i32, i32
  }
  func.func @transform_1(%arg0: i32) -> (i32, i32) {
    %c0_i32 = arith.constant 0 : i32
    %c0_i32_0 = arith.constant 0 : i32
    %c0_i32_1 = arith.constant 0 : i32
    return %c0_i32, %c0_i32_0 : i32, i32
  }
  func.func @transform_2(%arg0: i32) -> (i32, i32) {
    %c0_i32 = arith.constant 0 : i32
    %c0_i32_0 = arith.constant 0 : i32
    %c0_i32_1 = arith.constant 0 : i32
    return %c0_i32, %c0_i32_0 : i32, i32
  }
  func.func @transform_3(%arg0: i32) -> (i32, i32) {
    %c0_i32 = arith.constant 0 : i32
    %c0_i32_0 = arith.constant 0 : i32
    %c0_i32_1 = arith.constant 0 : i32
    return %c0_i32, %c0_i32_0 : i32, i32
  }
  func.func @transform_4(%arg0: i32) -> (i32, i32) {
    %c0_i32 = arith.constant 0 : i32
    %c0_i32_0 = arith.constant 0 : i32
    %c0_i32_1 = arith.constant 0 : i32
    return %c0_i32, %c0_i32_0 : i32, i32
  }
  func.func @transform_5(%arg0: i32) -> (i32, i32) {
    %c0_i32 = arith.constant 0 : i32
    %c0_i32_0 = arith.constant 0 : i32
    %c0_i32_1 = arith.constant 0 : i32
    return %c0_i32, %c0_i32_0 : i32, i32
  }
  func.func @transform_6(%arg0: i32) -> (i32, i32) {
    %c0_i32 = arith.constant 0 : i32
    %c0_i32_0 = arith.constant 0 : i32
    %c0_i32_1 = arith.constant 0 : i32
    return %c0_i32, %c0_i32_0 : i32, i32
  }
  func.func @transform_7(%arg0: i32) -> (i32, i32) {
    %c0_i32 = arith.constant 0 : i32
    %c0_i32_0 = arith.constant 0 : i32
    return %arg0, %c0_i32 : i32, i32
  }
}

</mosaic_0001>

<llo_original>
// kernel: value_network_forward.1
$region0: #{value_network_forward.1}
  #allocation0 [shape = 'u32[]', space=smem, size = 0x4, offset = 0x4, fixed_abs, tag = 'smem constant byte address 0x4 - core index']
  #allocation1 [shape = 'u32[72,128]{1,0:T(1,128)}', space=vmem, size = 0x9000, scoped, tag = 'internal scratch']
  #allocation2 [shape = 'f32[1,1]{1,0:T(1,128)S(1)}', space=vmem, size = 0x200, scoped, tag = 'scoped memory for value_network_forward.1']
  %s0 = inlined_call_operand.vmem [shape: bf16[256,32], index: 0, kind: input, shape index: {}]
  %s1 = inlined_call_operand.hbm [shape: bf16[32,256], index: 1, kind: input, shape index: {}]
  %s2 = inlined_call_operand.vmem [shape: f32[1,256], index: 2, kind: input, shape index: {}]
  %s3 = inlined_call_operand.vmem [shape: bf16[256,256], index: 3, kind: input, shape index: {}]
  %s4 = inlined_call_operand.vmem [shape: f32[1,256], index: 4, kind: input, shape index: {}]
  %s5 = inlined_call_operand.hbm [shape: f32[1,256], index: 5, kind: input, shape index: {}]
  %s6 = inlined_call_operand.<no memory space> [shape: f32[1,1], index: 6, kind: input, shape index: {}]
  %s7 = inlined_call_operand.vmem [shape: f32[256,1], index: 7, kind: output, shape index: {}]
  %s8 = sld [smem:[#allocation0]]
  $region46: #{value_network_forward.1} parent=0
    _
  %s10 = ssub.s32 1, %s8
  %s11 = scalar_select 0, %s10, %s8
  %v12 = vstv %s6
  %13 = vst [vmem:[#allocation2] sm:$0x1] %v12
  $region1: #{value_network_forward.1} parent=0
    #allocation3 [shape = 'u8[16384]{0}', space=vmem, size = 0x4000, scoped, tag = 'input window, operand 1, single buffered']
    #allocation4 [shape = 's32[1]{0}', space=sflag, size = 0x4, scoped, tag = 'scoped memory for value_network_forward.1']
    #allocation5 [shape = 'u8[1024]{0}', space=vmem, size = 0x400, scoped, tag = 'input window, operand 5, single buffered']
    #allocation6 [shape = 's32[1]{0}', space=sflag, size = 0x4, scoped, tag = 'scoped memory for value_network_forward.1']
    %14 = vsyncpa [#allocation4], 0
    %15 = vsyncpa [#allocation6], 0
    // Predicated region
    $region2: #{value_network_forward.1} parent=1 // pred_check
      _
    $region3: #{value_network_forward.1} parent=1 // pred_check_branch
      %17 = sbr.rel (0) target = $region5
    $region4: #{value_network_forward.1} parent=1 // pred_region
      _
    $region5: #{value_network_forward.1} parent=1 // pred_fallthru
      _
    // Predicated region
    $region6: #{value_network_forward.1} parent=1 // pred_check
      _
    $region7: #{value_network_forward.1} parent=1 // pred_check_branch
      %19 = sbr.rel (0) target = $region9
    $region8: #{value_network_forward.1} parent=1 // pred_region
      %21 = vsyncadd [#allocation4], 0
      %s22 = sshll.u32 %s1, 4
      %s23 = int_to_ptr.hbm [resolvable:$true] %s22
      %s24 = sshll.u32 [#allocation3], 4
      %s25 = int_to_ptr.vmem [resolvable:$true] %s24
      %30 = dma.hbm_to_vmem [thread:$0]  %s23, 512, %s25, [#allocation4], 128, 128, 8
    $region9: #{value_network_forward.1} parent=1 // pred_fallthru
      _
    // Predicated region
    $region10: #{value_network_forward.1} parent=1 // pred_check
      _
    $region11: #{value_network_forward.1} parent=1 // pred_check_branch
      %32 = sbr.rel (0) target = $region13
    $region12: #{value_network_forward.1} parent=1 // pred_region
      _
    $region13: #{value_network_forward.1} parent=1 // pred_fallthru
      _
    // Predicated region
    $region14: #{value_network_forward.1} parent=1 // pred_check
      _
    $region15: #{value_network_forward.1} parent=1 // pred_check_branch
      %34 = sbr.rel (0) target = $region17
    $region16: #{value_network_forward.1} parent=1 // pred_region
      _
    $region17: #{value_network_forward.1} parent=1 // pred_fallthru
      _
    // Predicated region
    $region18: #{value_network_forward.1} parent=1 // pred_check
      _
    $region19: #{value_network_forward.1} parent=1 // pred_check_branch
      %36 = sbr.rel (0) target = $region21
    $region20: #{value_network_forward.1} parent=1 // pred_region
      _
    $region21: #{value_network_forward.1} parent=1 // pred_fallthru
      _
    // Predicated region
    $region22: #{value_network_forward.1} parent=1 // pred_check
      _
    $region23: #{value_network_forward.1} parent=1 // pred_check_branch
      %38 = sbr.rel (0) target = $region25
    $region24: #{value_network_forward.1} parent=1 // pred_region
      %40 = vsyncadd [#allocation6], 0
      %s42 = sshll.u32 %s5, 4
      %s43 = int_to_ptr.hbm [resolvable:$true] %s42
      %s44 = sshll.u32 [#allocation5], 4
      %s45 = int_to_ptr.vmem [resolvable:$true] %s44
      %47 = dma.hbm_to_vmem [thread:$0]  %s43, 32, %s45, [#allocation6]
    $region25: #{value_network_forward.1} parent=1 // pred_fallthru
      _
    // Predicated region
    $region26: #{value_network_forward.1} parent=1 // pred_check
      _
    $region27: #{value_network_forward.1} parent=1 // pred_check_branch
      %49 = sbr.rel (0) target = $region29
    $region28: #{value_network_forward.1} parent=1 // pred_region
      _
    $region29: #{value_network_forward.1} parent=1 // pred_fallthru
      _
    // Predicated region
    $region30: #{value_network_forward.1} parent=1 // pred_check
      _
    $region31: #{value_network_forward.1} parent=1 // pred_check_branch
      %51 = sbr.rel (0) target = $region33
    $region32: #{value_network_forward.1} parent=1 // pred_region
      %53 = dma.done [#allocation4], 512
    $region33: #{value_network_forward.1} parent=1 // pred_fallthru
      _
    // Predicated region
    $region34: #{value_network_forward.1} parent=1 // pred_check
      _
    $region35: #{value_network_forward.1} parent=1 // pred_check_branch
      %55 = sbr.rel (0) target = $region37
    $region36: #{value_network_forward.1} parent=1 // pred_region
      %57 = dma.done [#allocation6], 32
    $region37: #{value_network_forward.1} parent=1 // pred_fallthru
      _
    %v59 = vld [vmem:[%s0] sm:$0xf]
    %v60 = vld [vmem:[%s0 + $0x4] sm:$0xf]
    %v61 = vld [vmem:[%s0 + $0x8] sm:$0xf]
    %v62 = vld [vmem:[%s0 + $0xc] sm:$0xf]
    %v63 = vld [vmem:[%s0 + $0x10] sm:$0xf]
    %v64 = vld [vmem:[%s0 + $0x14] sm:$0xf]
    %v65 = vld [vmem:[%s0 + $0x18] sm:$0xf]
    %v66 = vld [vmem:[%s0 + $0x1c] sm:$0xf]
    %v67 = vld [vmem:[%s0 + $0x20] sm:$0xf]
    %v68 = vld [vmem:[%s0 + $0x24] sm:$0xf]
    %v69 = vld [vmem:[%s0 + $0x28] sm:$0xf]
    %v70 = vld [vmem:[%s0 + $0x2c] sm:$0xf]
    %v71 = vld [vmem:[%s0 + $0x30] sm:$0xf]
    %v72 = vld [vmem:[%s0 + $0x34] sm:$0xf]
    %v73 = vld [vmem:[%s0 + $0x38] sm:$0xf]
    %v74 = vld [vmem:[%s0 + $0x3c] sm:$0xf]
    %v75 = vld [vmem:[%s0 + $0x40] sm:$0xf]
    %v76 = vld [vmem:[%s0 + $0x44] sm:$0xf]
    %v77 = vld [vmem:[%s0 + $0x48] sm:$0xf]
    %v78 = vld [vmem:[%s0 + $0x4c] sm:$0xf]
    %v79 = vld [vmem:[%s0 + $0x50] sm:$0xf]
    %v80 = vld [vmem:[%s0 + $0x54] sm:$0xf]
    %v81 = vld [vmem:[%s0 + $0x58] sm:$0xf]
    %v82 = vld [vmem:[%s0 + $0x5c] sm:$0xf]
    %v83 = vld [vmem:[%s0 + $0x60] sm:$0xf]
    %v84 = vld [vmem:[%s0 + $0x64] sm:$0xf]
    %v85 = vld [vmem:[%s0 + $0x68] sm:$0xf]
    %v86 = vld [vmem:[%s0 + $0x6c] sm:$0xf]
    %v87 = vld [vmem:[%s0 + $0x70] sm:$0xf]
    %v88 = vld [vmem:[%s0 + $0x74] sm:$0xf]
    %v89 = vld [vmem:[%s0 + $0x78] sm:$0xf]
    %v90 = vld [vmem:[%s0 + $0x7c] sm:$0xf]
    %v91 = vld [vmem:[#allocation3] sm:$0xff]
    %v92 = vld [vmem:[#allocation3 + $0x8] sm:$0xff]
    %v93 = vld [vmem:[#allocation3 + $0x10] sm:$0xff]
    %v94 = vld [vmem:[#allocation3 + $0x18] sm:$0xff]
    %v95 = vld [vmem:[%s2] sm:$0x3]
    %v97 = vperm.slane %v95, 0
    %v98 = vperm.slane %v95, 1
    %v133 = vunpack.c.l.b16 %v59
    %v134 = vunpack.c.l.b16 %v60
    %v135 = vunpack.c.l.b16 %v61
    %v136 = vunpack.c.l.b16 %v62
    %v137 = vunpack.c.l.b16 %v63
    %v138 = vunpack.c.l.b16 %v64
    %v139 = vunpack.c.l.b16 %v65
    %v140 = vunpack.c.l.b16 %v66
    %v141 = vunpack.c.l.b16 %v67
    %v142 = vunpack.c.l.b16 %v68
    %v143 = vunpack.c.l.b16 %v69
    %v144 = vunpack.c.l.b16 %v70
    %v145 = vunpack.c.l.b16 %v71
    %v146 = vunpack.c.l.b16 %v72
    %v147 = vunpack.c.l.b16 %v73
    %v148 = vunpack.c.l.b16 %v74
    %v149 = vunpack.c.l.b16 %v75
    %v150 = vunpack.c.l.b16 %v76
    %v151 = vunpack.c.l.b16 %v77
    %v152 = vunpack.c.l.b16 %v78
    %v153 = vunpack.c.l.b16 %v79
    %v154 = vunpack.c.l.b16 %v80
    %v155 = vunpack.c.l.b16 %v81
    %v156 = vunpack.c.l.b16 %v82
    %v157 = vunpack.c.l.b16 %v83
    %v158 = vunpack.c.l.b16 %v84
    %v159 = vunpack.c.l.b16 %v85
    %v160 = vunpack.c.l.b16 %v86
    %v161 = vunpack.c.l.b16 %v87
    %v162 = vunpack.c.l.b16 %v88
    %v163 = vunpack.c.l.b16 %v89
    %v164 = vunpack.c.l.b16 %v90
    %v165 = vpack.c.b16 %v134, %v133
    %v166 = vpack.c.b16 %v136, %v135
    %v167 = vpack.c.b16 %v138, %v137
    %v168 = vpack.c.b16 %v140, %v139
    %v169 = vpack.c.b16 %v142, %v141
    %v170 = vpack.c.b16 %v144, %v143
    %v171 = vpack.c.b16 %v146, %v145
    %v172 = vpack.c.b16 %v148, %v147
    %v173 = vpack.c.b16 %v150, %v149
    %v174 = vpack.c.b16 %v152, %v151
    %v175 = vpack.c.b16 %v154, %v153
    %v176 = vpack.c.b16 %v156, %v155
    %v177 = vpack.c.b16 %v158, %v157
    %v178 = vpack.c.b16 %v160, %v159
    %v179 = vpack.c.b16 %v162, %v161
    %v180 = vpack.c.b16 %v164, %v163
    %v185 = vunpack.c.l.b16 %v91
    %v186 = vunpack.c.h.b16 %v91
    %v187 = vunpack.c.l.b16 %v92
    %v188 = vunpack.c.h.b16 %v92
    %v189 = vunpack.c.l.b16 %v93
    %v190 = vunpack.c.h.b16 %v93
    %v191 = vunpack.c.l.b16 %v94
    %v192 = vunpack.c.h.b16 %v94
    %v193 = vpack.c.b16 %v187, %v185
    %v194 = vpack.c.b16 %v188, %v186
    %v195 = vpack.c.b16 %v191, %v189
    %v196 = vpack.c.b16 %v192, %v190
    %vm201 = vcmask 261120
    %v203 = vsel %vm201, %v165, 0
    %v206 = vsel %vm201, %v166, 0
    %v209 = vsel %vm201, %v167, 0
    %v212 = vsel %vm201, %v168, 0
    %v215 = vsel %vm201, %v169, 0
    %v218 = vsel %vm201, %v170, 0
    %v221 = vsel %vm201, %v171, 0
    %v224 = vsel %vm201, %v172, 0
    %v227 = vsel %vm201, %v173, 0
    %v230 = vsel %vm201, %v174, 0
    %v233 = vsel %vm201, %v175, 0
    %v236 = vsel %vm201, %v176, 0
    %v239 = vsel %vm201, %v177, 0
    %v242 = vsel %vm201, %v178, 0
    %v245 = vsel %vm201, %v179, 0
    %v248 = vsel %vm201, %v180, 0
    %250 = vmatpush.bf16.msra.mxu0 0
    %251 = vmatpush.bf16.msra.mxu0 0
    %252 = vmatpush.bf16.msra.mxu0 0
    %253 = vmatpush.bf16.msra.mxu0 0
    %254 = vmatpush.bf16.msra.mxu0 0
    %255 = vmatpush.bf16.msra.mxu0 0
    %256 = vmatpush.bf16.msra.mxu0 %v195
    %257 = vmatpush.bf16.msra.mxu0 %v193
    %258 = vmatmul.bf16.gmra.mxu0 %v203
    %v259 = vpop.f32.mrf.mxu0
    %v260 = vadd.f32 %v97, %v259
    %v261 = vpop.f32.mrf.mxu0
    %v262 = vadd.f32 %v97, %v261
    %263 = vmatmul.bf16.gmra.mxu0 %v206
    %v264 = vpop.f32.mrf.mxu0
    %v265 = vadd.f32 %v97, %v264
    %v266 = vpop.f32.mrf.mxu0
    %v267 = vadd.f32 %v97, %v266
    %268 = vmatmul.bf16.gmra.mxu0 %v209
    %v269 = vpop.f32.mrf.mxu0
    %v270 = vadd.f32 %v97, %v269
    %v271 = vpop.f32.mrf.mxu0
    %v272 = vadd.f32 %v97, %v271
    %273 = vmatmul.bf16.gmra.mxu0 %v212
    %v274 = vpop.f32.mrf.mxu0
    %v275 = vadd.f32 %v97, %v274
    %v276 = vpop.f32.mrf.mxu0
    %v277 = vadd.f32 %v97, %v276
    %278 = vmatmul.bf16.gmra.mxu0 %v215
    %v279 = vpop.f32.mrf.mxu0
    %v280 = vadd.f32 %v97, %v279
    %v281 = vpop.f32.mrf.mxu0
    %v282 = vadd.f32 %v97, %v281
    %283 = vmatmul.bf16.gmra.mxu0 %v218
    %v284 = vpop.f32.mrf.mxu0
    %v285 = vadd.f32 %v97, %v284
    %v286 = vpop.f32.mrf.mxu0
    %v287 = vadd.f32 %v97, %v286
    %288 = vmatmul.bf16.gmra.mxu0 %v221
    %v289 = vpop.f32.mrf.mxu0
    %v290 = vadd.f32 %v97, %v289
    %v291 = vpop.f32.mrf.mxu0
    %v292 = vadd.f32 %v97, %v291
    %293 = vmatmul.bf16.gmra.mxu0 %v224
    %v294 = vpop.f32.mrf.mxu0
    %v295 = vadd.f32 %v97, %v294
    %v296 = vpop.f32.mrf.mxu0
    %v297 = vadd.f32 %v97, %v296
    %298 = vmatmul.bf16.gmra.mxu0 %v227
    %v299 = vpop.f32.mrf.mxu0
    %v300 = vadd.f32 %v97, %v299
    %v301 = vpop.f32.mrf.mxu0
    %v302 = vadd.f32 %v97, %v301
    %303 = vmatmul.bf16.gmra.mxu0 %v230
    %v304 = vpop.f32.mrf.mxu0
    %v305 = vadd.f32 %v97, %v304
    %v306 = vpop.f32.mrf.mxu0
    %v307 = vadd.f32 %v97, %v306
    %308 = vmatmul.bf16.gmra.mxu0 %v233
    %v309 = vpop.f32.mrf.mxu0
    %v310 = vadd.f32 %v97, %v309
    %v311 = vpop.f32.mrf.mxu0
    %v312 = vadd.f32 %v97, %v311
    %313 = vmatmul.bf16.gmra.mxu0 %v236
    %v314 = vpop.f32.mrf.mxu0
    %v315 = vadd.f32 %v97, %v314
    %v316 = vpop.f32.mrf.mxu0
    %v317 = vadd.f32 %v97, %v316
    %318 = vmatmul.bf16.gmra.mxu0 %v239
    %v319 = vpop.f32.mrf.mxu0
    %v320 = vadd.f32 %v97, %v319
    %v321 = vpop.f32.mrf.mxu0
    %v322 = vadd.f32 %v97, %v321
    %323 = vmatmul.bf16.gmra.mxu0 %v242
    %v324 = vpop.f32.mrf.mxu0
    %v325 = vadd.f32 %v97, %v324
    %v326 = vpop.f32.mrf.mxu0
    %v327 = vadd.f32 %v97, %v326
    %328 = vmatmul.bf16.gmra.mxu0 %v245
    %v329 = vpop.f32.mrf.mxu0
    %v330 = vadd.f32 %v97, %v329
    %v331 = vpop.f32.mrf.mxu0
    %v332 = vadd.f32 %v97, %v331
    %333 = vmatmul.bf16.gmra.mxu0 %v248
    %v334 = vpop.f32.mrf.mxu0
    %v335 = vadd.f32 %v97, %v334
    %v336 = vpop.f32.mrf.mxu0
    %v337 = vadd.f32 %v97, %v336
    %338 = vdwg.mxu0
    %339 = vmatpush.bf16.msra.mxu0 0
    %340 = vmatpush.bf16.msra.mxu0 0
    %341 = vmatpush.bf16.msra.mxu0 0
    %342 = vmatpush.bf16.msra.mxu0 0
    %343 = vmatpush.bf16.msra.mxu0 0
    %344 = vmatpush.bf16.msra.mxu0 0
    %345 = vmatpush.bf16.msra.mxu0 %v196
    %346 = vmatpush.bf16.msra.mxu0 %v194
    %347 = vmatmul.bf16.gmra.mxu0 %v203
    %v348 = vpop.f32.mrf.mxu0
    %v349 = vadd.f32 %v98, %v348
    %v350 = vpop.f32.mrf.mxu0
    %v351 = vadd.f32 %v98, %v350
    %352 = vmatmul.bf16.gmra.mxu0 %v206
    %v353 = vpop.f32.mrf.mxu0
    %v354 = vadd.f32 %v98, %v353
    %v355 = vpop.f32.mrf.mxu0
    %v356 = vadd.f32 %v98, %v355
    %357 = vmatmul.bf16.gmra.mxu0 %v209
    %v358 = vpop.f32.mrf.mxu0
    %v359 = vadd.f32 %v98, %v358
    %v360 = vpop.f32.mrf.mxu0
    %v361 = vadd.f32 %v98, %v360
    %362 = vmatmul.bf16.gmra.mxu0 %v212
    %v363 = vpop.f32.mrf.mxu0
    %v364 = vadd.f32 %v98, %v363
    %v365 = vpop.f32.mrf.mxu0
    %v366 = vadd.f32 %v98, %v365
    %367 = vmatmul.bf16.gmra.mxu0 %v215
    %v368 = vpop.f32.mrf.mxu0
    %v369 = vadd.f32 %v98, %v368
    %v370 = vpop.f32.mrf.mxu0
    %v371 = vadd.f32 %v98, %v370
    %372 = vmatmul.bf16.gmra.mxu0 %v218
    %v373 = vpop.f32.mrf.mxu0
    %v374 = vadd.f32 %v98, %v373
    %v375 = vpop.f32.mrf.mxu0
    %v376 = vadd.f32 %v98, %v375
    %377 = vmatmul.bf16.gmra.mxu0 %v221
    %v378 = vpop.f32.mrf.mxu0
    %v379 = vadd.f32 %v98, %v378
    %v380 = vpop.f32.mrf.mxu0
    %v381 = vadd.f32 %v98, %v380
    %382 = vmatmul.bf16.gmra.mxu0 %v224
    %v383 = vpop.f32.mrf.mxu0
    %v384 = vadd.f32 %v98, %v383
    %v385 = vpop.f32.mrf.mxu0
    %v386 = vadd.f32 %v98, %v385
    %387 = vmatmul.bf16.gmra.mxu0 %v227
    %v388 = vpop.f32.mrf.mxu0
    %v389 = vadd.f32 %v98, %v388
    %v390 = vpop.f32.mrf.mxu0
    %v391 = vadd.f32 %v98, %v390
    %392 = vmatmul.bf16.gmra.mxu0 %v230
    %v393 = vpop.f32.mrf.mxu0
    %v394 = vadd.f32 %v98, %v393
    %v395 = vpop.f32.mrf.mxu0
    %v396 = vadd.f32 %v98, %v395
    %397 = vmatmul.bf16.gmra.mxu0 %v233
    %v398 = vpop.f32.mrf.mxu0
    %v399 = vadd.f32 %v98, %v398
    %v400 = vpop.f32.mrf.mxu0
    %v401 = vadd.f32 %v98, %v400
    %402 = vmatmul.bf16.gmra.mxu0 %v236
    %v403 = vpop.f32.mrf.mxu0
    %v404 = vadd.f32 %v98, %v403
    %v405 = vpop.f32.mrf.mxu0
    %v406 = vadd.f32 %v98, %v405
    %407 = vmatmul.bf16.gmra.mxu0 %v239
    %v408 = vpop.f32.mrf.mxu0
    %v409 = vadd.f32 %v98, %v408
    %v410 = vpop.f32.mrf.mxu0
    %v411 = vadd.f32 %v98, %v410
    %412 = vmatmul.bf16.gmra.mxu0 %v242
    %v413 = vpop.f32.mrf.mxu0
    %v414 = vadd.f32 %v98, %v413
    %v415 = vpop.f32.mrf.mxu0
    %v416 = vadd.f32 %v98, %v415
    %417 = vmatmul.bf16.gmra.mxu0 %v245
    %v418 = vpop.f32.mrf.mxu0
    %v419 = vadd.f32 %v98, %v418
    %v420 = vpop.f32.mrf.mxu0
    %v421 = vadd.f32 %v98, %v420
    %422 = vmatmul.bf16.gmra.mxu0 %v248
    %v423 = vpop.f32.mrf.mxu0
    %v424 = vadd.f32 %v98, %v423
    %v425 = vpop.f32.mrf.mxu0
    %v426 = vadd.f32 %v98, %v425
    %427 = vdwg.mxu0
    %v428 = vmax.f32 %v260, 0.0
    %v429 = vmax.f32 %v349, 0.0
    %v430 = vmax.f32 %v262, 0.0
    %v431 = vmax.f32 %v351, 0.0
    %v432 = vmax.f32 %v265, 0.0
    %v433 = vmax.f32 %v354, 0.0
    %v434 = vmax.f32 %v267, 0.0
    %v435 = vmax.f32 %v356, 0.0
    %v436 = vmax.f32 %v270, 0.0
    %v437 = vmax.f32 %v359, 0.0
    %v438 = vmax.f32 %v272, 0.0
    %v439 = vmax.f32 %v361, 0.0
    %v440 = vmax.f32 %v275, 0.0
    %v441 = vmax.f32 %v364, 0.0
    %v442 = vmax.f32 %v277, 0.0
    %v443 = vmax.f32 %v366, 0.0
    %v444 = vmax.f32 %v280, 0.0
    %v445 = vmax.f32 %v369, 0.0
    %v446 = vmax.f32 %v282, 0.0
    %v447 = vmax.f32 %v371, 0.0
    %v448 = vmax.f32 %v285, 0.0
    %v449 = vmax.f32 %v374, 0.0
    %v450 = vmax.f32 %v287, 0.0
    %v451 = vmax.f32 %v376, 0.0
    %v452 = vmax.f32 %v290, 0.0
    %v453 = vmax.f32 %v379, 0.0
    %v454 = vmax.f32 %v292, 0.0
    %v455 = vmax.f32 %v381, 0.0
    %v456 = vmax.f32 %v295, 0.0
    %v457 = vmax.f32 %v384, 0.0
    %v458 = vmax.f32 %v297, 0.0
    %v459 = vmax.f32 %v386, 0.0
    %v460 = vmax.f32 %v300, 0.0
    %v461 = vmax.f32 %v389, 0.0
    %v462 = vmax.f32 %v302, 0.0
    %v463 = vmax.f32 %v391, 0.0
    %v464 = vmax.f32 %v305, 0.0
    %v465 = vmax.f32 %v394, 0.0
    %v466 = vmax.f32 %v307, 0.0
    %v467 = vmax.f32 %v396, 0.0
    %v468 = vmax.f32 %v310, 0.0
    %v469 = vmax.f32 %v399, 0.0
    %v470 = vmax.f32 %v312, 0.0
    %v471 = vmax.f32 %v401, 0.0
    %v472 = vmax.f32 %v315, 0.0
    %v473 = vmax.f32 %v404, 0.0
    %v474 = vmax.f32 %v317, 0.0
    %v475 = vmax.f32 %v406, 0.0
    %v476 = vmax.f32 %v320, 0.0
    %v477 = vmax.f32 %v409, 0.0
    %v478 = vmax.f32 %v322, 0.0
    %v479 = vmax.f32 %v411, 0.0
    %v480 = vmax.f32 %v325, 0.0
    %v481 = vmax.f32 %v414, 0.0
    %v482 = vmax.f32 %v327, 0.0
    %v483 = vmax.f32 %v416, 0.0
    %v484 = vmax.f32 %v330, 0.0
    %v485 = vmax.f32 %v419, 0.0
    %v486 = vmax.f32 %v332, 0.0
    %v487 = vmax.f32 %v421, 0.0
    %v488 = vmax.f32 %v335, 0.0
    %v489 = vmax.f32 %v424, 0.0
    %v490 = vmax.f32 %v337, 0.0
    %v491 = vmax.f32 %v426, 0.0
    %v492 = vpack.c.bf16 %v430, %v428
    %v493 = vpack.c.bf16 %v431, %v429
    %v494 = vpack.c.bf16 %v434, %v432
    %v495 = vpack.c.bf16 %v435, %v433
    %v496 = vpack.c.bf16 %v438, %v436
    %v497 = vpack.c.bf16 %v439, %v437
    %v498 = vpack.c.bf16 %v442, %v440
    %v499 = vpack.c.bf16 %v443, %v441
    %v500 = vpack.c.bf16 %v446, %v444
    %v501 = vpack.c.bf16 %v447, %v445
    %v502 = vpack.c.bf16 %v450, %v448
    %v503 = vpack.c.bf16 %v451, %v449
    %v504 = vpack.c.bf16 %v454, %v452
    %v505 = vpack.c.bf16 %v455, %v453
    %v506 = vpack.c.bf16 %v458, %v456
    %v507 = vpack.c.bf16 %v459, %v457
    %v508 = vpack.c.bf16 %v462, %v460
    %v509 = vpack.c.bf16 %v463, %v461
    %v510 = vpack.c.bf16 %v466, %v464
    %v511 = vpack.c.bf16 %v467, %v465
    %v512 = vpack.c.bf16 %v470, %v468
    %v513 = vpack.c.bf16 %v471, %v469
    %v514 = vpack.c.bf16 %v474, %v472
    %v515 = vpack.c.bf16 %v475, %v473
    %v516 = vpack.c.bf16 %v478, %v476
    %v517 = vpack.c.bf16 %v479, %v477
    %v518 = vpack.c.bf16 %v482, %v480
    %v519 = vpack.c.bf16 %v483, %v481
    %v520 = vpack.c.bf16 %v486, %v484
    %v521 = vpack.c.bf16 %v487, %v485
    %v522 = vpack.c.bf16 %v490, %v488
    %v523 = vpack.c.bf16 %v491, %v489
    %v524 = vld [vmem:[%s3] sm:$0xff]
    %v525 = vld [vmem:[%s3 + $0x8] sm:$0xff]
    %v526 = vld [vmem:[%s3 + $0x10] sm:$0xff]
    %v527 = vld [vmem:[%s3 + $0x18] sm:$0xff]
    %v528 = vld [vmem:[%s3 + $0x20] sm:$0xff]
    %v529 = vld [vmem:[%s3 + $0x28] sm:$0xff]
    %v530 = vld [vmem:[%s3 + $0x30] sm:$0xff]
    %v531 = vld [vmem:[%s3 + $0x38] sm:$0xff]
    %v532 = vld [vmem:[%s3 + $0x40] sm:$0xff]
    %v533 = vld [vmem:[%s3 + $0x48] sm:$0xff]
    %v534 = vld [vmem:[%s3 + $0x50] sm:$0xff]
    %v535 = vld [vmem:[%s3 + $0x58] sm:$0xff]
    %v536 = vld [vmem:[%s3 + $0x60] sm:$0xff]
    %v537 = vld [vmem:[%s3 + $0x68] sm:$0xff]
    %v538 = vld [vmem:[%s3 + $0x70] sm:$0xff]
    %v539 = vld [vmem:[%s3 + $0x78] sm:$0xff]
    %v540 = vld [vmem:[%s3 + $0x80] sm:$0xff]
    %v541 = vld [vmem:[%s3 + $0x88] sm:$0xff]
    %v542 = vld [vmem:[%s3 + $0x90] sm:$0xff]
    %v543 = vld [vmem:[%s3 + $0x98] sm:$0xff]
    %v544 = vld [vmem:[%s3 + $0xa0] sm:$0xff]
    %v545 = vld [vmem:[%s3 + $0xa8] sm:$0xff]
    %v546 = vld [vmem:[%s3 + $0xb0] sm:$0xff]
    %v547 = vld [vmem:[%s3 + $0xb8] sm:$0xff]
    %v548 = vld [vmem:[%s3 + $0xc0] sm:$0xff]
    %v549 = vld [vmem:[%s3 + $0xc8] sm:$0xff]
    %v550 = vld [vmem:[%s3 + $0xd0] sm:$0xff]
    %v551 = vld [vmem:[%s3 + $0xd8] sm:$0xff]
    %v552 = vld [vmem:[%s3 + $0xe0] sm:$0xff]
    %v553 = vld [vmem:[%s3 + $0xe8] sm:$0xff]
    %v554 = vld [vmem:[%s3 + $0xf0] sm:$0xff]
    %v555 = vld [vmem:[%s3 + $0xf8] sm:$0xff]
    %v556 = vld [vmem:[%s4] sm:$0x3]
    %v558 = vperm.slane %v556, 0
    %v559 = vperm.slane %v556, 1
    %v594 = vunpack.c.l.b16 %v524
    %v595 = vunpack.c.h.b16 %v524
    %v596 = vunpack.c.l.b16 %v525
    %v597 = vunpack.c.h.b16 %v525
    %v598 = vunpack.c.l.b16 %v526
    %v599 = vunpack.c.h.b16 %v526
    %v600 = vunpack.c.l.b16 %v527
    %v601 = vunpack.c.h.b16 %v527
    %v602 = vunpack.c.l.b16 %v528
    %v603 = vunpack.c.h.b16 %v528
    %v604 = vunpack.c.l.b16 %v529
    %v605 = vunpack.c.h.b16 %v529
    %v606 = vunpack.c.l.b16 %v530
    %v607 = vunpack.c.h.b16 %v530
    %v608 = vunpack.c.l.b16 %v531
    %v609 = vunpack.c.h.b16 %v531
    %v610 = vunpack.c.l.b16 %v532
    %v611 = vunpack.c.h.b16 %v532
    %v612 = vunpack.c.l.b16 %v533
    %v613 = vunpack.c.h.b16 %v533
    %v614 = vunpack.c.l.b16 %v534
    %v615 = vunpack.c.h.b16 %v534
    %v616 = vunpack.c.l.b16 %v535
    %v617 = vunpack.c.h.b16 %v535
    %v618 = vunpack.c.l.b16 %v536
    %v619 = vunpack.c.h.b16 %v536
    %v620 = vunpack.c.l.b16 %v537
    %v621 = vunpack.c.h.b16 %v537
    %v622 = vunpack.c.l.b16 %v538
    %v623 = vunpack.c.h.b16 %v538
    %v624 = vunpack.c.l.b16 %v539
    %v625 = vunpack.c.h.b16 %v539
    %v626 = vunpack.c.l.b16 %v540
    %v627 = vunpack.c.h.b16 %v540
    %v628 = vunpack.c.l.b16 %v541
    %v629 = vunpack.c.h.b16 %v541
    %v630 = vunpack.c.l.b16 %v542
    %v631 = vunpack.c.h.b16 %v542
    %v632 = vunpack.c.l.b16 %v543
    %v633 = vunpack.c.h.b16 %v543
    %v634 = vunpack.c.l.b16 %v544
    %v635 = vunpack.c.h.b16 %v544
    %v636 = vunpack.c.l.b16 %v545
    %v637 = vunpack.c.h.b16 %v545
    %v638 = vunpack.c.l.b16 %v546
    %v639 = vunpack.c.h.b16 %v546
    %v640 = vunpack.c.l.b16 %v547
    %v641 = vunpack.c.h.b16 %v547
    %v642 = vunpack.c.l.b16 %v548
    %v643 = vunpack.c.h.b16 %v548
    %v644 = vunpack.c.l.b16 %v549
    %v645 = vunpack.c.h.b16 %v549
    %v646 = vunpack.c.l.b16 %v550
    %v647 = vunpack.c.h.b16 %v550
    %v648 = vunpack.c.l.b16 %v551
    %v649 = vunpack.c.h.b16 %v551
    %v650 = vunpack.c.l.b16 %v552
    %v651 = vunpack.c.h.b16 %v552
    %v652 = vunpack.c.l.b16 %v553
    %v653 = vunpack.c.h.b16 %v553
    %v654 = vunpack.c.l.b16 %v554
    %v655 = vunpack.c.h.b16 %v554
    %v656 = vunpack.c.l.b16 %v555
    %v657 = vunpack.c.h.b16 %v555
    %v658 = vpack.c.b16 %v596, %v594
    %v659 = vpack.c.b16 %v597, %v595
    %v660 = vpack.c.b16 %v600, %v598
    %v661 = vpack.c.b16 %v601, %v599
    %v662 = vpack.c.b16 %v604, %v602
    %v663 = vpack.c.b16 %v605, %v603
    %v664 = vpack.c.b16 %v608, %v606
    %v665 = vpack.c.b16 %v609, %v607
    %v666 = vpack.c.b16 %v612, %v610
    %v667 = vpack.c.b16 %v613, %v611
    %v668 = vpack.c.b16 %v616, %v614
    %v669 = vpack.c.b16 %v617, %v615
    %v670 = vpack.c.b16 %v620, %v618
    %v671 = vpack.c.b16 %v621, %v619
    %v672 = vpack.c.b16 %v624, %v622
    %v673 = vpack.c.b16 %v625, %v623
    %v674 = vpack.c.b16 %v628, %v626
    %v675 = vpack.c.b16 %v629, %v627
    %v676 = vpack.c.b16 %v632, %v630
    %v677 = vpack.c.b16 %v633, %v631
    %v678 = vpack.c.b16 %v636, %v634
    %v679 = vpack.c.b16 %v637, %v635
    %v680 = vpack.c.b16 %v640, %v638
    %v681 = vpack.c.b16 %v641, %v639
    %v682 = vpack.c.b16 %v644, %v642
    %v683 = vpack.c.b16 %v645, %v643
    %v684 = vpack.c.b16 %v648, %v646
    %v685 = vpack.c.b16 %v649, %v647
    %v686 = vpack.c.b16 %v652, %v650
    %v687 = vpack.c.b16 %v653, %v651
    %v688 = vpack.c.b16 %v656, %v654
    %v689 = vpack.c.b16 %v657, %v655
    %722 = vmatpush.bf16.msra.mxu0 %v672
    %723 = vmatpush.bf16.msra.mxu0 %v670
    %724 = vmatpush.bf16.msra.mxu0 %v668
    %725 = vmatpush.bf16.msra.mxu0 %v666
    %726 = vmatpush.bf16.msra.mxu0 %v664
    %727 = vmatpush.bf16.msra.mxu0 %v662
    %728 = vmatpush.bf16.msra.mxu0 %v660
    %729 = vmatpush.bf16.msra.mxu0 %v658
    %730 = vmatmul.bf16.gmra.mxu0 %v492
    %v731 = vpop.f32.mrf.mxu0
    %v732 = vadd.f32 %v558, %v731
    %v733 = vpop.f32.mrf.mxu0
    %v734 = vadd.f32 %v558, %v733
    %735 = vmatmul.bf16.gmra.mxu0 %v494
    %v736 = vpop.f32.mrf.mxu0
    %v737 = vadd.f32 %v558, %v736
    %v738 = vpop.f32.mrf.mxu0
    %v739 = vadd.f32 %v558, %v738
    %740 = vmatmul.bf16.gmra.mxu0 %v496
    %v741 = vpop.f32.mrf.mxu0
    %v742 = vadd.f32 %v558, %v741
    %v743 = vpop.f32.mrf.mxu0
    %v744 = vadd.f32 %v558, %v743
    %745 = vmatmul.bf16.gmra.mxu0 %v498
    %v746 = vpop.f32.mrf.mxu0
    %v747 = vadd.f32 %v558, %v746
    %v748 = vpop.f32.mrf.mxu0
    %v749 = vadd.f32 %v558, %v748
    %750 = vmatmul.bf16.gmra.mxu0 %v500
    %v751 = vpop.f32.mrf.mxu0
    %v752 = vadd.f32 %v558, %v751
    %v753 = vpop.f32.mrf.mxu0
    %v754 = vadd.f32 %v558, %v753
    %755 = vmatmul.bf16.gmra.mxu0 %v502
    %v756 = vpop.f32.mrf.mxu0
    %v757 = vadd.f32 %v558, %v756
    %v758 = vpop.f32.mrf.mxu0
    %v759 = vadd.f32 %v558, %v758
    %760 = vmatmul.bf16.gmra.mxu0 %v504
    %v761 = vpop.f32.mrf.mxu0
    %v762 = vadd.f32 %v558, %v761
    %v763 = vpop.f32.mrf.mxu0
    %v764 = vadd.f32 %v558, %v763
    %765 = vmatmul.bf16.gmra.mxu0 %v506
    %v766 = vpop.f32.mrf.mxu0
    %v767 = vadd.f32 %v558, %v766
    %v768 = vpop.f32.mrf.mxu0
    %v769 = vadd.f32 %v558, %v768
    %770 = vmatmul.bf16.gmra.mxu0 %v508
    %v771 = vpop.f32.mrf.mxu0
    %v772 = vadd.f32 %v558, %v771
    %v773 = vpop.f32.mrf.mxu0
    %v774 = vadd.f32 %v558, %v773
    %775 = vmatmul.bf16.gmra.mxu0 %v510
    %v776 = vpop.f32.mrf.mxu0
    %v777 = vadd.f32 %v558, %v776
    %v778 = vpop.f32.mrf.mxu0
    %v779 = vadd.f32 %v558, %v778
    %780 = vmatmul.bf16.gmra.mxu0 %v512
    %v781 = vpop.f32.mrf.mxu0
    %v782 = vadd.f32 %v558, %v781
    %v783 = vpop.f32.mrf.mxu0
    %v784 = vadd.f32 %v558, %v783
    %785 = vmatmul.bf16.gmra.mxu0 %v514
    %v786 = vpop.f32.mrf.mxu0
    %v787 = vadd.f32 %v558, %v786
    %v788 = vpop.f32.mrf.mxu0
    %v789 = vadd.f32 %v558, %v788
    %790 = vmatmul.bf16.gmra.mxu0 %v516
    %v791 = vpop.f32.mrf.mxu0
    %v792 = vadd.f32 %v558, %v791
    %v793 = vpop.f32.mrf.mxu0
    %v794 = vadd.f32 %v558, %v793
    %795 = vmatmul.bf16.gmra.mxu0 %v518
    %v796 = vpop.f32.mrf.mxu0
    %v797 = vadd.f32 %v558, %v796
    %v798 = vpop.f32.mrf.mxu0
    %v799 = vadd.f32 %v558, %v798
    %800 = vmatmul.bf16.gmra.mxu0 %v520
    %v801 = vpop.f32.mrf.mxu0
    %v802 = vadd.f32 %v558, %v801
    %v803 = vpop.f32.mrf.mxu0
    %v804 = vadd.f32 %v558, %v803
    %805 = vmatmul.bf16.gmra.mxu0 %v522
    %v806 = vpop.f32.mrf.mxu0
    %v807 = vadd.f32 %v558, %v806
    %v808 = vpop.f32.mrf.mxu0
    %v809 = vadd.f32 %v558, %v808
    %810 = vdwg.mxu0
    %811 = vmatpush.bf16.msra.mxu0 %v688
    %812 = vmatpush.bf16.msra.mxu0 %v686
    %813 = vmatpush.bf16.msra.mxu0 %v684
    %814 = vmatpush.bf16.msra.mxu0 %v682
    %815 = vmatpush.bf16.msra.mxu0 %v680
    %816 = vmatpush.bf16.msra.mxu0 %v678
    %817 = vmatpush.bf16.msra.mxu0 %v676
    %818 = vmatpush.bf16.msra.mxu0 %v674
    %819 = vmatmul.bf16.gmra.mxu0 %v493
    %v820 = vpop.f32.mrf.mxu0
    %v821 = vadd.f32 %v732, %v820
    %v822 = vpop.f32.mrf.mxu0
    %v823 = vadd.f32 %v734, %v822
    %824 = vmatmul.bf16.gmra.mxu0 %v495
    %v825 = vpop.f32.mrf.mxu0
    %v826 = vadd.f32 %v737, %v825
    %v827 = vpop.f32.mrf.mxu0
    %v828 = vadd.f32 %v739, %v827
    %829 = vmatmul.bf16.gmra.mxu0 %v497
    %v830 = vpop.f32.mrf.mxu0
    %v831 = vadd.f32 %v742, %v830
    %v832 = vpop.f32.mrf.mxu0
    %v833 = vadd.f32 %v744, %v832
    %834 = vmatmul.bf16.gmra.mxu0 %v499
    %v835 = vpop.f32.mrf.mxu0
    %v836 = vadd.f32 %v747, %v835
    %v837 = vpop.f32.mrf.mxu0
    %v838 = vadd.f32 %v749, %v837
    %839 = vmatmul.bf16.gmra.mxu0 %v501
    %v840 = vpop.f32.mrf.mxu0
    %v841 = vadd.f32 %v752, %v840
    %v842 = vpop.f32.mrf.mxu0
    %v843 = vadd.f32 %v754, %v842
    %844 = vmatmul.bf16.gmra.mxu0 %v503
    %v845 = vpop.f32.mrf.mxu0
    %v846 = vadd.f32 %v757, %v845
    %v847 = vpop.f32.mrf.mxu0
    %v848 = vadd.f32 %v759, %v847
    %849 = vmatmul.bf16.gmra.mxu0 %v505
    %v850 = vpop.f32.mrf.mxu0
    %v851 = vadd.f32 %v762, %v850
    %v852 = vpop.f32.mrf.mxu0
    %v853 = vadd.f32 %v764, %v852
    %854 = vmatmul.bf16.gmra.mxu0 %v507
    %v855 = vpop.f32.mrf.mxu0
    %v856 = vadd.f32 %v767, %v855
    %v857 = vpop.f32.mrf.mxu0
    %v858 = vadd.f32 %v769, %v857
    %859 = vmatmul.bf16.gmra.mxu0 %v509
    %v860 = vpop.f32.mrf.mxu0
    %v861 = vadd.f32 %v772, %v860
    %v862 = vpop.f32.mrf.mxu0
    %v863 = vadd.f32 %v774, %v862
    %864 = vmatmul.bf16.gmra.mxu0 %v511
    %v865 = vpop.f32.mrf.mxu0
    %v866 = vadd.f32 %v777, %v865
    %v867 = vpop.f32.mrf.mxu0
    %v868 = vadd.f32 %v779, %v867
    %869 = vmatmul.bf16.gmra.mxu0 %v513
    %v870 = vpop.f32.mrf.mxu0
    %v871 = vadd.f32 %v782, %v870
    %v872 = vpop.f32.mrf.mxu0
    %v873 = vadd.f32 %v784, %v872
    %874 = vmatmul.bf16.gmra.mxu0 %v515
    %v875 = vpop.f32.mrf.mxu0
    %v876 = vadd.f32 %v787, %v875
    %v877 = vpop.f32.mrf.mxu0
    %v878 = vadd.f32 %v789, %v877
    %879 = vmatmul.bf16.gmra.mxu0 %v517
    %v880 = vpop.f32.mrf.mxu0
    %v881 = vadd.f32 %v792, %v880
    %v882 = vpop.f32.mrf.mxu0
    %v883 = vadd.f32 %v794, %v882
    %884 = vmatmul.bf16.gmra.mxu0 %v519
    %v885 = vpop.f32.mrf.mxu0
    %v886 = vadd.f32 %v797, %v885
    %v887 = vpop.f32.mrf.mxu0
    %v888 = vadd.f32 %v799, %v887
    %889 = vmatmul.bf16.gmra.mxu0 %v521
    %v890 = vpop.f32.mrf.mxu0
    %v891 = vadd.f32 %v802, %v890
    %v892 = vpop.f32.mrf.mxu0
    %v893 = vadd.f32 %v804, %v892
    %894 = vmatmul.bf16.gmra.mxu0 %v523
    %v895 = vpop.f32.mrf.mxu0
    %v896 = vadd.f32 %v807, %v895
    %v897 = vpop.f32.mrf.mxu0
    %v898 = vadd.f32 %v809, %v897
    %899 = vdwg.mxu0
    %900 = vmatpush.bf16.msra.mxu0 %v673
    %901 = vmatpush.bf16.msra.mxu0 %v671
    %902 = vmatpush.bf16.msra.mxu0 %v669
    %903 = vmatpush.bf16.msra.mxu0 %v667
    %904 = vmatpush.bf16.msra.mxu0 %v665
    %905 = vmatpush.bf16.msra.mxu0 %v663
    %906 = vmatpush.bf16.msra.mxu0 %v661
    %907 = vmatpush.bf16.msra.mxu0 %v659
    %908 = vmatmul.bf16.gmra.mxu0 %v492
    %v909 = vpop.f32.mrf.mxu0
    %v910 = vadd.f32 %v559, %v909
    %v911 = vpop.f32.mrf.mxu0
    %v912 = vadd.f32 %v559, %v911
    %913 = vmatmul.bf16.gmra.mxu0 %v494
    %v914 = vpop.f32.mrf.mxu0
    %v915 = vadd.f32 %v559, %v914
    %v916 = vpop.f32.mrf.mxu0
    %v917 = vadd.f32 %v559, %v916
    %918 = vmatmul.bf16.gmra.mxu0 %v496
    %v919 = vpop.f32.mrf.mxu0
    %v920 = vadd.f32 %v559, %v919
    %v921 = vpop.f32.mrf.mxu0
    %v922 = vadd.f32 %v559, %v921
    %923 = vmatmul.bf16.gmra.mxu0 %v498
    %v924 = vpop.f32.mrf.mxu0
    %v925 = vadd.f32 %v559, %v924
    %v926 = vpop.f32.mrf.mxu0
    %v927 = vadd.f32 %v559, %v926
    %928 = vmatmul.bf16.gmra.mxu0 %v500
    %v929 = vpop.f32.mrf.mxu0
    %v930 = vadd.f32 %v559, %v929
    %v931 = vpop.f32.mrf.mxu0
    %v932 = vadd.f32 %v559, %v931
    %933 = vmatmul.bf16.gmra.mxu0 %v502
    %v934 = vpop.f32.mrf.mxu0
    %v935 = vadd.f32 %v559, %v934
    %v936 = vpop.f32.mrf.mxu0
    %v937 = vadd.f32 %v559, %v936
    %938 = vmatmul.bf16.gmra.mxu0 %v504
    %v939 = vpop.f32.mrf.mxu0
    %v940 = vadd.f32 %v559, %v939
    %v941 = vpop.f32.mrf.mxu0
    %v942 = vadd.f32 %v559, %v941
    %943 = vmatmul.bf16.gmra.mxu0 %v506
    %v944 = vpop.f32.mrf.mxu0
    %v945 = vadd.f32 %v559, %v944
    %v946 = vpop.f32.mrf.mxu0
    %v947 = vadd.f32 %v559, %v946
    %948 = vmatmul.bf16.gmra.mxu0 %v508
    %v949 = vpop.f32.mrf.mxu0
    %v950 = vadd.f32 %v559, %v949
    %v951 = vpop.f32.mrf.mxu0
    %v952 = vadd.f32 %v559, %v951
    %953 = vmatmul.bf16.gmra.mxu0 %v510
    %v954 = vpop.f32.mrf.mxu0
    %v955 = vadd.f32 %v559, %v954
    %v956 = vpop.f32.mrf.mxu0
    %v957 = vadd.f32 %v559, %v956
    %958 = vmatmul.bf16.gmra.mxu0 %v512
    %v959 = vpop.f32.mrf.mxu0
    %v960 = vadd.f32 %v559, %v959
    %v961 = vpop.f32.mrf.mxu0
    %v962 = vadd.f32 %v559, %v961
    %963 = vmatmul.bf16.gmra.mxu0 %v514
    %v964 = vpop.f32.mrf.mxu0
    %v965 = vadd.f32 %v559, %v964
    %v966 = vpop.f32.mrf.mxu0
    %v967 = vadd.f32 %v559, %v966
    %968 = vmatmul.bf16.gmra.mxu0 %v516
    %v969 = vpop.f32.mrf.mxu0
    %v970 = vadd.f32 %v559, %v969
    %v971 = vpop.f32.mrf.mxu0
    %v972 = vadd.f32 %v559, %v971
    %973 = vmatmul.bf16.gmra.mxu0 %v518
    %v974 = vpop.f32.mrf.mxu0
    %v975 = vadd.f32 %v559, %v974
    %v976 = vpop.f32.mrf.mxu0
    %v977 = vadd.f32 %v559, %v976
    %978 = vmatmul.bf16.gmra.mxu0 %v520
    %v979 = vpop.f32.mrf.mxu0
    %v980 = vadd.f32 %v559, %v979
    %v981 = vpop.f32.mrf.mxu0
    %v982 = vadd.f32 %v559, %v981
    %983 = vmatmul.bf16.gmra.mxu0 %v522
    %v984 = vpop.f32.mrf.mxu0
    %v985 = vadd.f32 %v559, %v984
    %v986 = vpop.f32.mrf.mxu0
    %v987 = vadd.f32 %v559, %v986
    %988 = vdwg.mxu0
    %989 = vmatpush.bf16.msra.mxu0 %v689
    %990 = vmatpush.bf16.msra.mxu0 %v687
    %991 = vmatpush.bf16.msra.mxu0 %v685
    %992 = vmatpush.bf16.msra.mxu0 %v683
    %993 = vmatpush.bf16.msra.mxu0 %v681
    %994 = vmatpush.bf16.msra.mxu0 %v679
    %995 = vmatpush.bf16.msra.mxu0 %v677
    %996 = vmatpush.bf16.msra.mxu0 %v675
    %997 = vmatmul.bf16.gmra.mxu0 %v493
    %v998 = vpop.f32.mrf.mxu0
    %v999 = vadd.f32 %v910, %v998
    %v1000 = vpop.f32.mrf.mxu0
    %v1001 = vadd.f32 %v912, %v1000
    %1002 = vmatmul.bf16.gmra.mxu0 %v495
    %v1003 = vpop.f32.mrf.mxu0
    %v1004 = vadd.f32 %v915, %v1003
    %v1005 = vpop.f32.mrf.mxu0
    %v1006 = vadd.f32 %v917, %v1005
    %1007 = vmatmul.bf16.gmra.mxu0 %v497
    %v1008 = vpop.f32.mrf.mxu0
    %v1009 = vadd.f32 %v920, %v1008
    %v1010 = vpop.f32.mrf.mxu0
    %v1011 = vadd.f32 %v922, %v1010
    %1012 = vmatmul.bf16.gmra.mxu0 %v499
    %v1013 = vpop.f32.mrf.mxu0
    %v1014 = vadd.f32 %v925, %v1013
    %v1015 = vpop.f32.mrf.mxu0
    %v1016 = vadd.f32 %v927, %v1015
    %1017 = vmatmul.bf16.gmra.mxu0 %v501
    %v1018 = vpop.f32.mrf.mxu0
    %v1019 = vadd.f32 %v930, %v1018
    %v1020 = vpop.f32.mrf.mxu0
    %v1021 = vadd.f32 %v932, %v1020
    %1022 = vmatmul.bf16.gmra.mxu0 %v503
    %v1023 = vpop.f32.mrf.mxu0
    %v1024 = vadd.f32 %v935, %v1023
    %v1025 = vpop.f32.mrf.mxu0
    %v1026 = vadd.f32 %v937, %v1025
    %1027 = vmatmul.bf16.gmra.mxu0 %v505
    %v1028 = vpop.f32.mrf.mxu0
    %v1029 = vadd.f32 %v940, %v1028
    %v1030 = vpop.f32.mrf.mxu0
    %v1031 = vadd.f32 %v942, %v1030
    %1032 = vmatmul.bf16.gmra.mxu0 %v507
    %v1033 = vpop.f32.mrf.mxu0
    %v1034 = vadd.f32 %v945, %v1033
    %v1035 = vpop.f32.mrf.mxu0
    %v1036 = vadd.f32 %v947, %v1035
    %1037 = vmatmul.bf16.gmra.mxu0 %v509
    %v1038 = vpop.f32.mrf.mxu0
    %v1039 = vadd.f32 %v950, %v1038
    %v1040 = vpop.f32.mrf.mxu0
    %v1041 = vadd.f32 %v952, %v1040
    %1042 = vmatmul.bf16.gmra.mxu0 %v511
    %v1043 = vpop.f32.mrf.mxu0
    %v1044 = vadd.f32 %v955, %v1043
    %v1045 = vpop.f32.mrf.mxu0
    %v1046 = vadd.f32 %v957, %v1045
    %1047 = vmatmul.bf16.gmra.mxu0 %v513
    %v1048 = vpop.f32.mrf.mxu0
    %v1049 = vadd.f32 %v960, %v1048
    %v1050 = vpop.f32.mrf.mxu0
    %v1051 = vadd.f32 %v962, %v1050
    %1052 = vmatmul.bf16.gmra.mxu0 %v515
    %v1053 = vpop.f32.mrf.mxu0
    %v1054 = vadd.f32 %v965, %v1053
    %v1055 = vpop.f32.mrf.mxu0
    %v1056 = vadd.f32 %v967, %v1055
    %1057 = vmatmul.bf16.gmra.mxu0 %v517
    %v1058 = vpop.f32.mrf.mxu0
    %v1059 = vadd.f32 %v970, %v1058
    %v1060 = vpop.f32.mrf.mxu0
    %v1061 = vadd.f32 %v972, %v1060
    %1062 = vmatmul.bf16.gmra.mxu0 %v519
    %v1063 = vpop.f32.mrf.mxu0
    %v1064 = vadd.f32 %v975, %v1063
    %v1065 = vpop.f32.mrf.mxu0
    %v1066 = vadd.f32 %v977, %v1065
    %1067 = vmatmul.bf16.gmra.mxu0 %v521
    %v1068 = vpop.f32.mrf.mxu0
    %v1069 = vadd.f32 %v980, %v1068
    %v1070 = vpop.f32.mrf.mxu0
    %v1071 = vadd.f32 %v982, %v1070
    %1072 = vmatmul.bf16.gmra.mxu0 %v523
    %v1073 = vpop.f32.mrf.mxu0
    %v1074 = vadd.f32 %v985, %v1073
    %v1075 = vpop.f32.mrf.mxu0
    %v1076 = vadd.f32 %v987, %v1075
    %1077 = vdwg.mxu0
    %v1078 = vmax.f32 %v821, 0.0
    %v1079 = vmax.f32 %v999, 0.0
    %v1080 = vmax.f32 %v823, 0.0
    %v1081 = vmax.f32 %v1001, 0.0
    %v1082 = vmax.f32 %v826, 0.0
    %v1083 = vmax.f32 %v1004, 0.0
    %v1084 = vmax.f32 %v828, 0.0
    %v1085 = vmax.f32 %v1006, 0.0
    %v1086 = vmax.f32 %v831, 0.0
    %v1087 = vmax.f32 %v1009, 0.0
    %v1088 = vmax.f32 %v833, 0.0
    %v1089 = vmax.f32 %v1011, 0.0
    %v1090 = vmax.f32 %v836, 0.0
    %v1091 = vmax.f32 %v1014, 0.0
    %v1092 = vmax.f32 %v838, 0.0
    %v1093 = vmax.f32 %v1016, 0.0
    %v1094 = vmax.f32 %v841, 0.0
    %v1095 = vmax.f32 %v1019, 0.0
    %v1096 = vmax.f32 %v843, 0.0
    %v1097 = vmax.f32 %v1021, 0.0
    %v1098 = vmax.f32 %v846, 0.0
    %v1099 = vmax.f32 %v1024, 0.0
    %v1100 = vmax.f32 %v848, 0.0
    %v1101 = vmax.f32 %v1026, 0.0
    %v1102 = vmax.f32 %v851, 0.0
    %v1103 = vmax.f32 %v1029, 0.0
    %v1104 = vmax.f32 %v853, 0.0
    %v1105 = vmax.f32 %v1031, 0.0
    %v1106 = vmax.f32 %v856, 0.0
    %v1107 = vmax.f32 %v1034, 0.0
    %v1108 = vmax.f32 %v858, 0.0
    %v1109 = vmax.f32 %v1036, 0.0
    %v1110 = vmax.f32 %v861, 0.0
    %v1111 = vmax.f32 %v1039, 0.0
    %v1112 = vmax.f32 %v863, 0.0
    %v1113 = vmax.f32 %v1041, 0.0
    %v1114 = vmax.f32 %v866, 0.0
    %v1115 = vmax.f32 %v1044, 0.0
    %v1116 = vmax.f32 %v868, 0.0
    %v1117 = vmax.f32 %v1046, 0.0
    %v1118 = vmax.f32 %v871, 0.0
    %v1119 = vmax.f32 %v1049, 0.0
    %v1120 = vmax.f32 %v873, 0.0
    %v1121 = vmax.f32 %v1051, 0.0
    %v1122 = vmax.f32 %v876, 0.0
    %v1123 = vmax.f32 %v1054, 0.0
    %v1124 = vmax.f32 %v878, 0.0
    %v1125 = vmax.f32 %v1056, 0.0
    %v1126 = vmax.f32 %v881, 0.0
    %v1127 = vmax.f32 %v1059, 0.0
    %v1128 = vmax.f32 %v883, 0.0
    %v1129 = vmax.f32 %v1061, 0.0
    %v1130 = vmax.f32 %v886, 0.0
    %v1131 = vmax.f32 %v1064, 0.0
    %v1132 = vmax.f32 %v888, 0.0
    %v1133 = vmax.f32 %v1066, 0.0
    %v1134 = vmax.f32 %v891, 0.0
    %v1135 = vmax.f32 %v1069, 0.0
    %v1136 = vmax.f32 %v893, 0.0
    %v1137 = vmax.f32 %v1071, 0.0
    %v1138 = vmax.f32 %v896, 0.0
    %v1139 = vmax.f32 %v1074, 0.0
    %v1140 = vmax.f32 %v898, 0.0
    %v1141 = vmax.f32 %v1076, 0.0
    %v1142 = vld [vmem:[#allocation5] sm:$0x3]
    %v1144 = vperm.slane %v1142, 0
    %v1145 = vperm.slane %v1142, 1
    %v1148 = vmul.f32 %v1078, %v1144
    %v1149 = vmul.f32 %v1079, %v1145
    %v1150 = vmul.f32 %v1080, %v1144
    %v1151 = vmul.f32 %v1081, %v1145
    %v1152 = vmul.f32 %v1082, %v1144
    %v1153 = vmul.f32 %v1083, %v1145
    %v1154 = vmul.f32 %v1084, %v1144
    %v1155 = vmul.f32 %v1085, %v1145
    %v1156 = vmul.f32 %v1086, %v1144
    %v1157 = vmul.f32 %v1087, %v1145
    %v1158 = vmul.f32 %v1088, %v1144
    %v1159 = vmul.f32 %v1089, %v1145
    %v1160 = vmul.f32 %v1090, %v1144
    %v1161 = vmul.f32 %v1091, %v1145
    %v1162 = vmul.f32 %v1092, %v1144
    %v1163 = vmul.f32 %v1093, %v1145
    %v1164 = vmul.f32 %v1094, %v1144
    %v1165 = vmul.f32 %v1095, %v1145
    %v1166 = vmul.f32 %v1096, %v1144
    %v1167 = vmul.f32 %v1097, %v1145
    %v1168 = vmul.f32 %v1098, %v1144
    %v1169 = vmul.f32 %v1099, %v1145
    %v1170 = vmul.f32 %v1100, %v1144
    %v1171 = vmul.f32 %v1101, %v1145
    %v1172 = vmul.f32 %v1102, %v1144
    %v1173 = vmul.f32 %v1103, %v1145
    %v1174 = vmul.f32 %v1104, %v1144
    %v1175 = vmul.f32 %v1105, %v1145
    %v1176 = vmul.f32 %v1106, %v1144
    %v1177 = vmul.f32 %v1107, %v1145
    %v1178 = vmul.f32 %v1108, %v1144
    %v1179 = vmul.f32 %v1109, %v1145
    %v1180 = vmul.f32 %v1110, %v1144
    %v1181 = vmul.f32 %v1111, %v1145
    %v1182 = vmul.f32 %v1112, %v1144
    %v1183 = vmul.f32 %v1113, %v1145
    %v1184 = vmul.f32 %v1114, %v1144
    %v1185 = vmul.f32 %v1115, %v1145
    %v1186 = vmul.f32 %v1116, %v1144
    %v1187 = vmul.f32 %v1117, %v1145
    %v1188 = vmul.f32 %v1118, %v1144
    %v1189 = vmul.f32 %v1119, %v1145
    %v1190 = vmul.f32 %v1120, %v1144
    %v1191 = vmul.f32 %v1121, %v1145
    %v1192 = vmul.f32 %v1122, %v1144
    %v1193 = vmul.f32 %v1123, %v1145
    %v1194 = vmul.f32 %v1124, %v1144
    %v1195 = vmul.f32 %v1125, %v1145
    %v1196 = vmul.f32 %v1126, %v1144
    %v1197 = vmul.f32 %v1127, %v1145
    %v1198 = vmul.f32 %v1128, %v1144
    %v1199 = vmul.f32 %v1129, %v1145
    %v1200 = vmul.f32 %v1130, %v1144
    %v1201 = vmul.f32 %v1131, %v1145
    %v1202 = vmul.f32 %v1132, %v1144
    %v1203 = vmul.f32 %v1133, %v1145
    %v1204 = vmul.f32 %v1134, %v1144
    %v1205 = vmul.f32 %v1135, %v1145
    %v1206 = vmul.f32 %v1136, %v1144
    %v1207 = vmul.f32 %v1137, %v1145
    %v1208 = vmul.f32 %v1138, %v1144
    %v1209 = vmul.f32 %v1139, %v1145
    %v1210 = vmul.f32 %v1140, %v1144
    %v1211 = vmul.f32 %v1141, %v1145
    %v1212 = vadd.f32 %v1148, %v1149
    %1213 = vadd.xlane.f32.xlu0 %v1212
    %v1214 = vpop.xlane.xlu0 %1213
    %v1215 = vadd.f32 %v1150, %v1151
    %1216 = vadd.xlane.f32.xlu0 %v1215
    %v1217 = vpop.xlane.xlu0 %1216
    %v1218 = vadd.f32 %v1152, %v1153
    %1219 = vadd.xlane.f32.xlu0 %v1218
    %v1220 = vpop.xlane.xlu0 %1219
    %v1221 = vadd.f32 %v1154, %v1155
    %1222 = vadd.xlane.f32.xlu0 %v1221
    %v1223 = vpop.xlane.xlu0 %1222
    %v1224 = vadd.f32 %v1156, %v1157
    %1225 = vadd.xlane.f32.xlu0 %v1224
    %v1226 = vpop.xlane.xlu0 %1225
    %v1227 = vadd.f32 %v1158, %v1159
    %1228 = vadd.xlane.f32.xlu0 %v1227
    %v1229 = vpop.xlane.xlu0 %1228
    %v1230 = vadd.f32 %v1160, %v1161
    %1231 = vadd.xlane.f32.xlu0 %v1230
    %v1232 = vpop.xlane.xlu0 %1231
    %v1233 = vadd.f32 %v1162, %v1163
    %1234 = vadd.xlane.f32.xlu0 %v1233
    %v1235 = vpop.xlane.xlu0 %1234
    %v1236 = vadd.f32 %v1164, %v1165
    %1237 = vadd.xlane.f32.xlu0 %v1236
    %v1238 = vpop.xlane.xlu0 %1237
    %v1239 = vadd.f32 %v1166, %v1167
    %1240 = vadd.xlane.f32.xlu0 %v1239
    %v1241 = vpop.xlane.xlu0 %1240
    %v1242 = vadd.f32 %v1168, %v1169
    %1243 = vadd.xlane.f32.xlu0 %v1242
    %v1244 = vpop.xlane.xlu0 %1243
    %v1245 = vadd.f32 %v1170, %v1171
    %1246 = vadd.xlane.f32.xlu0 %v1245
    %v1247 = vpop.xlane.xlu0 %1246
    %v1248 = vadd.f32 %v1172, %v1173
    %1249 = vadd.xlane.f32.xlu0 %v1248
    %v1250 = vpop.xlane.xlu0 %1249
    %v1251 = vadd.f32 %v1174, %v1175
    %1252 = vadd.xlane.f32.xlu0 %v1251
    %v1253 = vpop.xlane.xlu0 %1252
    %v1254 = vadd.f32 %v1176, %v1177
    %1255 = vadd.xlane.f32.xlu0 %v1254
    %v1256 = vpop.xlane.xlu0 %1255
    %v1257 = vadd.f32 %v1178, %v1179
    %1258 = vadd.xlane.f32.xlu0 %v1257
    %v1259 = vpop.xlane.xlu0 %1258
    %v1260 = vadd.f32 %v1180, %v1181
    %1261 = vadd.xlane.f32.xlu0 %v1260
    %v1262 = vpop.xlane.xlu0 %1261
    %v1263 = vadd.f32 %v1182, %v1183
    %1264 = vadd.xlane.f32.xlu0 %v1263
    %v1265 = vpop.xlane.xlu0 %1264
    %v1266 = vadd.f32 %v1184, %v1185
    %1267 = vadd.xlane.f32.xlu0 %v1266
    %v1268 = vpop.xlane.xlu0 %1267
    %v1269 = vadd.f32 %v1186, %v1187
    %1270 = vadd.xlane.f32.xlu0 %v1269
    %v1271 = vpop.xlane.xlu0 %1270
    %v1272 = vadd.f32 %v1188, %v1189
    %1273 = vadd.xlane.f32.xlu0 %v1272
    %v1274 = vpop.xlane.xlu0 %1273
    %v1275 = vadd.f32 %v1190, %v1191
    %1276 = vadd.xlane.f32.xlu0 %v1275
    %v1277 = vpop.xlane.xlu0 %1276
    %v1278 = vadd.f32 %v1192, %v1193
    %1279 = vadd.xlane.f32.xlu0 %v1278
    %v1280 = vpop.xlane.xlu0 %1279
    %v1281 = vadd.f32 %v1194, %v1195
    %1282 = vadd.xlane.f32.xlu0 %v1281
    %v1283 = vpop.xlane.xlu0 %1282
    %v1284 = vadd.f32 %v1196, %v1197
    %1285 = vadd.xlane.f32.xlu0 %v1284
    %v1286 = vpop.xlane.xlu0 %1285
    %v1287 = vadd.f32 %v1198, %v1199
    %1288 = vadd.xlane.f32.xlu0 %v1287
    %v1289 = vpop.xlane.xlu0 %1288
    %v1290 = vadd.f32 %v1200, %v1201
    %1291 = vadd.xlane.f32.xlu0 %v1290
    %v1292 = vpop.xlane.xlu0 %1291
    %v1293 = vadd.f32 %v1202, %v1203
    %1294 = vadd.xlane.f32.xlu0 %v1293
    %v1295 = vpop.xlane.xlu0 %1294
    %v1296 = vadd.f32 %v1204, %v1205
    %1297 = vadd.xlane.f32.xlu0 %v1296
    %v1298 = vpop.xlane.xlu0 %1297
    %v1299 = vadd.f32 %v1206, %v1207
    %1300 = vadd.xlane.f32.xlu0 %v1299
    %v1301 = vpop.xlane.xlu0 %1300
    %v1302 = vadd.f32 %v1208, %v1209
    %1303 = vadd.xlane.f32.xlu0 %v1302
    %v1304 = vpop.xlane.xlu0 %1303
    %v1305 = vadd.f32 %v1210, %v1211
    %1306 = vadd.xlane.f32.xlu0 %v1305
    %v1307 = vpop.xlane.xlu0 %1306
    %v1308 = vld [vmem:[#allocation2] sm:$0x1]
    %v1310 = vperm.slane %v1308, 0
    %v1312 = vadd.f32 %v1214, %v1310
    %v1313 = vadd.f32 %v1217, %v1310
    %v1314 = vadd.f32 %v1220, %v1310
    %v1315 = vadd.f32 %v1223, %v1310
    %v1316 = vadd.f32 %v1226, %v1310
    %v1317 = vadd.f32 %v1229, %v1310
    %v1318 = vadd.f32 %v1232, %v1310
    %v1319 = vadd.f32 %v1235, %v1310
    %v1320 = vadd.f32 %v1238, %v1310
    %v1321 = vadd.f32 %v1241, %v1310
    %v1322 = vadd.f32 %v1244, %v1310
    %v1323 = vadd.f32 %v1247, %v1310
    %v1324 = vadd.f32 %v1250, %v1310
    %v1325 = vadd.f32 %v1253, %v1310
    %v1326 = vadd.f32 %v1256, %v1310
    %v1327 = vadd.f32 %v1259, %v1310
    %v1328 = vadd.f32 %v1262, %v1310
    %v1329 = vadd.f32 %v1265, %v1310
    %v1330 = vadd.f32 %v1268, %v1310
    %v1331 = vadd.f32 %v1271, %v1310
    %v1332 = vadd.f32 %v1274, %v1310
    %v1333 = vadd.f32 %v1277, %v1310
    %v1334 = vadd.f32 %v1280, %v1310
    %v1335 = vadd.f32 %v1283, %v1310
    %v1336 = vadd.f32 %v1286, %v1310
    %v1337 = vadd.f32 %v1289, %v1310
    %v1338 = vadd.f32 %v1292, %v1310
    %v1339 = vadd.f32 %v1295, %v1310
    %v1340 = vadd.f32 %v1298, %v1310
    %v1341 = vadd.f32 %v1301, %v1310
    %v1342 = vadd.f32 %v1304, %v1310
    %v1343 = vadd.f32 %v1307, %v1310
    %vm1344 = vcmask 7168
    %1345 = vst.msk [vmem:[%s7] sm:$0xff] %vm1344, %v1312
    %1346 = vst.msk [vmem:[%s7 + $0x8] sm:$0xff] %vm1344, %v1313
    %1347 = vst.msk [vmem:[%s7 + $0x10] sm:$0xff] %vm1344, %v1314
    %1348 = vst.msk [vmem:[%s7 + $0x18] sm:$0xff] %vm1344, %v1315
    %1349 = vst.msk [vmem:[%s7 + $0x20] sm:$0xff] %vm1344, %v1316
    %1350 = vst.msk [vmem:[%s7 + $0x28] sm:$0xff] %vm1344, %v1317
    %1351 = vst.msk [vmem:[%s7 + $0x30] sm:$0xff] %vm1344, %v1318
    %1352 = vst.msk [vmem:[%s7 + $0x38] sm:$0xff] %vm1344, %v1319
    %1353 = vst.msk [vmem:[%s7 + $0x40] sm:$0xff] %vm1344, %v1320
    %1354 = vst.msk [vmem:[%s7 + $0x48] sm:$0xff] %vm1344, %v1321
    %1355 = vst.msk [vmem:[%s7 + $0x50] sm:$0xff] %vm1344, %v1322
    %1356 = vst.msk [vmem:[%s7 + $0x58] sm:$0xff] %vm1344, %v1323
    %1357 = vst.msk [vmem:[%s7 + $0x60] sm:$0xff] %vm1344, %v1324
    %1358 = vst.msk [vmem:[%s7 + $0x68] sm:$0xff] %vm1344, %v1325
    %1359 = vst.msk [vmem:[%s7 + $0x70] sm:$0xff] %vm1344, %v1326
    %1360 = vst.msk [vmem:[%s7 + $0x78] sm:$0xff] %vm1344, %v1327
    %1361 = vst.msk [vmem:[%s7 + $0x80] sm:$0xff] %vm1344, %v1328
    %1362 = vst.msk [vmem:[%s7 + $0x88] sm:$0xff] %vm1344, %v1329
    %1363 = vst.msk [vmem:[%s7 + $0x90] sm:$0xff] %vm1344, %v1330
    %1364 = vst.msk [vmem:[%s7 + $0x98] sm:$0xff] %vm1344, %v1331
    %1365 = vst.msk [vmem:[%s7 + $0xa0] sm:$0xff] %vm1344, %v1332
    %1366 = vst.msk [vmem:[%s7 + $0xa8] sm:$0xff] %vm1344, %v1333
    %1367 = vst.msk [vmem:[%s7 + $0xb0] sm:$0xff] %vm1344, %v1334
    %1368 = vst.msk [vmem:[%s7 + $0xb8] sm:$0xff] %vm1344, %v1335
    %1369 = vst.msk [vmem:[%s7 + $0xc0] sm:$0xff] %vm1344, %v1336
    %1370 = vst.msk [vmem:[%s7 + $0xc8] sm:$0xff] %vm1344, %v1337
    %1371 = vst.msk [vmem:[%s7 + $0xd0] sm:$0xff] %vm1344, %v1338
    %1372 = vst.msk [vmem:[%s7 + $0xd8] sm:$0xff] %vm1344, %v1339
    %1373 = vst.msk [vmem:[%s7 + $0xe0] sm:$0xff] %vm1344, %v1340
    %1374 = vst.msk [vmem:[%s7 + $0xe8] sm:$0xff] %vm1344, %v1341
    %1375 = vst.msk [vmem:[%s7 + $0xf0] sm:$0xff] %vm1344, %v1342
    %1376 = vst.msk [vmem:[%s7 + $0xf8] sm:$0xff] %vm1344, %v1343
    // Predicated region
    $region38: #{value_network_forward.1} parent=1 // pred_check
      _
    $region39: #{value_network_forward.1} parent=1 // pred_check_branch
      %1378 = sbr.rel (0) target = $region41
    $region40: #{value_network_forward.1} parent=1 // pred_region
      _
    $region41: #{value_network_forward.1} parent=1 // pred_fallthru
      _
    // Predicated region
    $region42: #{value_network_forward.1} parent=1 // pred_check
      _
    $region43: #{value_network_forward.1} parent=1 // pred_check_branch
      %1380 = sbr.rel (0) target = $region45
    $region44: #{value_network_forward.1} parent=1 // pred_region
      _
    $region45: #{value_network_forward.1} parent=1 // pred_fallthru
      _
    %1381 = vsyncpa [#allocation4], 1
    %1382 = vsyncpa [#allocation6], 1

</llo_original>
